<compile_context>
chip_gen: v6e
topology: v6e:2x2x1
jax: 0.10.0
libtpu: 0.0.40
codegen_flags: <defaults>
</compile_context>

<pallas_src>
import jax
import jax.numpy as jnp
from jax.experimental import pallas as pl
from jax.experimental.pallas import tpu as pltpu

STATE_DIM = 52
ACTION_DIM = 2
HIDDEN = 256
INIT_W = 0.003
_H2 = 2 * HIDDEN  # fused layer-1 output width (both heads side by side)


# ----------------------------------------------------------------------------
# Kernel
# ----------------------------------------------------------------------------
def _q_net_fused_kernel(
    s_ref, a_ref,
    w1s_ref, w1a_ref, b1_ref,     # fused layer 1: [W1 | W4] split into state/action rows
    w2_ref, b2_ref,               # head-1 layer 2: W2 (256, 256)
    w5_ref, b5_ref,               # head-2 layer 2: W5 (256, 256)
    w36_ref, b36_ref,             # fused layer 3: blockdiag(W3, W6) -> (512, 2)
    q_ref,                        # (B, 2): q1 in column 0, q2 in column 1
):
    f32 = jnp.float32
    w_dt = w2_ref.dtype  # bf16 in the fast path, f32 in the exact path

    # ---- fused layer 1 ([W1 | W4]) ----
    # Cast activations DOWN to the weight dtype: native bf16xbf16->f32 MXU mode,
    # no in-kernel weight upcast (the (B, dim) casts are far smaller than the
    # old (512, 512) weight cast).
    s = s_ref[...].astype(w_dt)
    a = a_ref[...].astype(w_dt)
    h1 = jnp.dot(s, w1s_ref[...], preferred_element_type=f32)
    # K = ACTION_DIM = 2 dot: an extra MXU push is essentially free here.
    h1 = h1 + jnp.dot(a, w1a_ref[...], preferred_element_type=f32)
    h1 = jnp.maximum(h1 + b1_ref[...], 0.0)                       # (B, 512) f32

    # ---- layer 2: two dense (256, 256) dots on lane-aligned halves ----
    h1c = h1.astype(w_dt)
    h2a = jnp.maximum(
        jnp.dot(h1c[:, :HIDDEN], w2_ref[...], preferred_element_type=f32)
        + b2_ref[...], 0.0)                                        # (B, 256) f32
    h2b = jnp.maximum(
        jnp.dot(h1c[:, HIDDEN:], w5_ref[...], preferred_element_type=f32)
        + b5_ref[...], 0.0)                                        # (B, 256) f32

    # ---- fused layer 3 (blockdiag(l3, l6)): lane-packed (B, 2) output ----
    q = (jnp.dot(h2a, w36_ref[:HIDDEN, :], preferred_element_type=f32)
         + jnp.dot(h2b, w36_ref[HIDDEN:, :], preferred_element_type=f32)
         + b36_ref[...])
    q_ref[...] = q.astype(q_ref.dtype)


# ----------------------------------------------------------------------------
# One-time parameter preparation (NOT on the per-step forward path)
# ----------------------------------------------------------------------------
def prepare_params(params, weights_dtype=jnp.bfloat16):
    """Fuse the six PyTorch-layout Linear layers into the kernel operands.

    params: dict with PyTorch-convention weights w{i}: (out, in), b{i}: (out,).
    Hidden-layer weights are stored in `weights_dtype` (bf16 by default) to
    halve the per-call weight DMA; biases and the final layer stay f32.
    """
    f32 = jnp.float32
    w1 = params["w1"].T.astype(f32)   # (54, 256)
    w4 = params["w4"].T.astype(f32)
    w14 = jnp.concatenate([w1, w4], axis=1)                       # (54, 512)

    w3 = params["w3"].T.astype(f32)   # (256, 1)
    w6 = params["w6"].T.astype(f32)
    zh1 = jnp.zeros((HIDDEN, 1), f32)
    w36 = jnp.block([[w3, zh1], [zh1, w6]])                       # (512, 2)

    return {
        "w14_s": w14[:STATE_DIM].astype(weights_dtype),           # (52, 512)
        "w14_a": w14[STATE_DIM:].astype(weights_dtype),           # (2, 512)
        "b14": jnp.concatenate([params["b1"], params["b4"]]).reshape(1, -1).astype(f32),
        "w2": params["w2"].T.astype(weights_dtype),               # (256, 256)
        "b2": params["b2"].reshape(1, -1).astype(f32),
        "w5": params["w5"].T.astype(weights_dtype),               # (256, 256)
        "b5": params["b5"].reshape(1, -1).astype(f32),
        "w36": w36,                                               # (512, 2) stays f32
        "b36": jnp.concatenate([params["b3"], params["b6"]]).reshape(1, -1).astype(f32),
    }


# ----------------------------------------------------------------------------
# Forward wrapper
# ----------------------------------------------------------------------------
def _round_up(x, m):
    return ((x + m - 1) // m) * m


def q_net_forward(s, a, fused, *, batch_block=256, single_call_max=256):
    """Twin-Q forward.  s: (B, 52), a: (B, 2), fused: output of prepare_params.

    Returns (q1, q2), each (B, 1), matching Q_net.forward.
    """
    s = s.astype(jnp.float32)
    a = a.astype(jnp.float32)
    B = s.shape[0]

    weight_bytes = sum(int(v.size) * v.dtype.itemsize for v in fused.values())
    cost = pl.CostEstimate(
        flops=2 * B * ((STATE_DIM + ACTION_DIM) * _H2        # fused layer 1
                       + 2 * HIDDEN * HIDDEN                 # two dense 256x256 layer-2 dots
                       + 2 * HIDDEN * 2),                    # two K=256, N=2 layer-3 dots
        transcendentals=0,
        bytes_accessed=weight_bytes + 4 * (int(s.size) + int(a.size) + 2 * B),
    )

    kernel_args = (
        s, a,
        fused["w14_s"], fused["w14_a"], fused["b14"],
        fused["w2"], fused["b2"],
        fused["w5"], fused["b5"],
        fused["w36"], fused["b36"],
    )

    if B <= single_call_max:
        # Everything fits comfortably in VMEM (< 1 MiB of weights): one call.
        vmem = pl.BlockSpec(memory_space=pltpu.MemorySpace.VMEM)
        q = pl.pallas_call(
            _q_net_fused_kernel,
            out_shape=jax.ShapeDtypeStruct((B, 2), jnp.float32),
            in_specs=[vmem] * len(kernel_args),
            out_specs=vmem,
            cost_estimate=cost,
        )(*kernel_args)
    else:
        # Training-size batch: parallel batch grid.  Block size is capped so we
        # always get >= 2 blocks (keeps both v7x TensorCores busy); Pallas masks
        # the partial last block, so no wrapper-side pad / slice is needed.
        blk = min(batch_block, _round_up((B + 1) // 2, 128))
        blk = max(blk, 8)
        nblk = pl.cdiv(B, blk)

        def rep(i):  # weights / biases replicated across the batch grid
            return (0, 0)

        q = pl.pallas_call(
            _q_net_fused_kernel,
            out_shape=jax.ShapeDtypeStruct((B, 2), jnp.float32),
            grid_spec=pltpu.PrefetchScalarGridSpec(
                num_scalar_prefetch=0,
                grid=(nblk,),
                in_specs=[
                    pl.BlockSpec((blk, STATE_DIM), lambda i: (i, 0)),
                    pl.BlockSpec((blk, ACTION_DIM), lambda i: (i, 0)),
                    pl.BlockSpec(fused["w14_s"].shape, rep),
                    pl.BlockSpec(fused["w14_a"].shape, rep),
                    pl.BlockSpec(fused["b14"].shape, rep),
                    pl.BlockSpec(fused["w2"].shape, rep),
                    pl.BlockSpec(fused["b2"].shape, rep),
                    pl.BlockSpec(fused["w5"].shape, rep),
                    pl.BlockSpec(fused["b5"].shape, rep),
                    pl.BlockSpec(fused["w36"].shape, rep),
                    pl.BlockSpec(fused["b36"].shape, rep),
                ],
                out_specs=pl.BlockSpec((blk, 2), lambda i: (i, 0)),
            ),
            compiler_params=pltpu.CompilerParams(
                dimension_semantics=("parallel",)),
            cost_estimate=cost,
        )(*kernel_args)

    return q[:, 0:1], q[:, 1:2]


# ----------------------------------------------------------------------------
# Initialization (mirrors Q_net.__init__) and pure-JAX references
# ----------------------------------------------------------------------------
def init_params(key, state_dim=STATE_DIM, action_dim=ACTION_DIM, init_w=INIT_W):
    in_dim = state_dim + action_dim
    layer_dims = {
        1: (HIDDEN, in_dim), 2: (HIDDEN, HIDDEN), 3: (1, HIDDEN),
        4: (HIDDEN, in_dim), 5: (HIDDEN, HIDDEN), 6: (1, HIDDEN),
    }
    params = {}
    keys = jax.random.split(key, 12)
    for idx, i in enumerate(sorted(layer_dims)):
        out_f, in_f = layer_dims[i]
        bound = init_w if i in (3, 6) else 1.0 / float(jnp.sqrt(in_f))
        wkey, bkey = keys[2 * idx], keys[2 * idx + 1]
        params[f"w{i}"] = jax.random.uniform(
            wkey, (out_f, in_f), jnp.float32, minval=-bound, maxval=bound)
        params[f"b{i}"] = jax.random.uniform(
            bkey, (out_f,), jnp.float32, minval=-bound, maxval=bound)
    return params


def q_net_reference(s, a, params):
    """Per-layer PyTorch-convention reference (the original module math)."""
    sa = jnp.concatenate([s, a], axis=1)

    def lin(x, i):
        return x @ params[f"w{i}"].T + params[f"b{i}"]

    q1 = lin(jax.nn.relu(lin(jax.nn.relu(lin(sa, 1)), 2)), 3)
    q2 = lin(jax.nn.relu(lin(jax.nn.relu(lin(sa, 4)), 5)), 6)
    return q1, q2


def q_net_reference_fused(s, a, fused):
    """Reference mirroring the kernel's dtype handling (bf16 activation casts)."""
    f32 = jnp.float32
    wdt = fused["w2"].dtype
    sc = s.astype(wdt)
    ac = a.astype(wdt)
    h1 = (jnp.dot(sc, fused["w14_s"], preferred_element_type=f32)
          + jnp.dot(ac, fused["w14_a"], preferred_element_type=f32)
          + fused["b14"])
    h1 = jax.nn.relu(h1)
    h1c = h1.astype(wdt)
    h2a = jax.nn.relu(
        jnp.dot(h1c[:, :HIDDEN], fused["w2"], preferred_element_type=f32) + fused["b2"])
    h2b = jax.nn.relu(
        jnp.dot(h1c[:, HIDDEN:], fused["w5"], preferred_element_type=f32) + fused["b5"])
    q = (jnp.dot(h2a, fused["w36"][:HIDDEN], preferred_element_type=f32)
         + jnp.dot(h2b, fused["w36"][HIDDEN:], preferred_element_type=f32)
         + fused["b36"])
    return q[:, 0:1], q[:, 1:2]


# ----------------------------------------------------------------------------
if __name__ == "__main__":
    key = jax.random.PRNGKey(0)
    pkey, skey, akey, sk2, ak2 = jax.random.split(key, 5)

    params = init_params(pkey)

    # ---- small batch, f32 weights (exact path): check vs original module math ----
    B = 8
    s = jax.random.normal(skey, (B, STATE_DIM), jnp.float32)
    a = jax.random.normal(akey, (B, ACTION_DIM), jnp.float32)

    fused_f32 = prepare_params(params, weights_dtype=jnp.float32)
    q1, q2 = q_net_forward(s, a, fused_f32)
    q1 = jax.block_until_ready(q1)
    q2 = jax.block_until_ready(q2)
    q1_ref, q2_ref = q_net_reference(s, a, params)
    assert q1.shape == (B, 1) and q2.shape == (B, 1)
    assert jnp.allclose(q1, q1_ref, atol=1e-4, rtol=1e-4)
    assert jnp.allclose(q2, q2_ref, atol=1e-4, rtol=1e-4)

    # ---- default perf config: bf16 weights + bf16 activation casts, f32 accumulation ----
    fused_bf16 = prepare_params(params)
    q1b, q2b = q_net_forward(s, a, fused_bf16)
    q1b = jax.block_until_ready(q1b)
    q2b = jax.block_until_ready(q2b)
    q1b_ref, q2b_ref = q_net_reference_fused(s, a, fused_bf16)
    assert jnp.allclose(q1b, q1b_ref, atol=1e-2, rtol=1e-2)
    assert jnp.allclose(q2b, q2b_ref, atol=1e-2, rtol=1e-2)

    # ---- training-size batch: parallel grid path, non-divisible B exercises the
    #      no-pad partial-block masking (f32 weights keep the strict gate) ----
    Bt = 320
    st = jax.random.normal(sk2, (Bt, STATE_DIM), jnp.float32)
    at = jax.random.normal(ak2, (Bt, ACTION_DIM), jnp.float32)
    q1t, q2t = q_net_forward(st, at, fused_f32)
    q1t = jax.block_until_ready(q1t)
    q2t = jax.block_until_ready(q2t)
    q1t_ref, q2t_ref = q_net_reference(st, at, params)
    assert q1t.shape == (Bt, 1) and q2t.shape == (Bt, 1)
    assert jnp.allclose(q1t, q1t_ref, atol=1e-4, rtol=1e-4)
    assert jnp.allclose(q2t, q2t_ref, atol=1e-4, rtol=1e-4)

    print("KERNEL_OK")
</pallas_src>

<mosaic_0001>
module attributes {stable_mosaic.version = 11 : i64} {
  func.func @_q_net_fused_kernel(%arg0: memref<8x52xf32, #tpu.memory_space<vmem>>, %arg1: memref<8x2xf32, #tpu.memory_space<vmem>>, %arg2: memref<52x512xf32, #tpu.memory_space<vmem>>, %arg3: memref<2x512xf32, #tpu.memory_space<vmem>>, %arg4: memref<1x512xf32, #tpu.memory_space<vmem>>, %arg5: memref<256x256xf32, #tpu.memory_space<vmem>>, %arg6: memref<1x256xf32, #tpu.memory_space<vmem>>, %arg7: memref<256x256xf32, #tpu.memory_space<vmem>>, %arg8: memref<1x256xf32, #tpu.memory_space<vmem>>, %arg9: memref<512x2xf32, #tpu.memory_space<vmem>>, %arg10: memref<1x2xf32, #tpu.memory_space<vmem>>, %arg11: memref<8x2xf32, #tpu.memory_space<vmem>>) attributes {dimension_semantics = [], scalar_prefetch = 0 : i64, scratch_operands = 0 : i64, tpu.core_type = #tpu.core_type<tc>} {
    %c0 = arith.constant 0 : index
    %c0_0 = arith.constant 0 : index
    %0 = vector.load %arg0[%c0, %c0_0] : memref<8x52xf32, #tpu.memory_space<vmem>>, vector<8x52xf32>
    %c0_1 = arith.constant 0 : index
    %c0_2 = arith.constant 0 : index
    %1 = vector.load %arg1[%c0_1, %c0_2] : memref<8x2xf32, #tpu.memory_space<vmem>>, vector<8x2xf32>
    %c0_3 = arith.constant 0 : index
    %c0_4 = arith.constant 0 : index
    %2 = vector.load %arg2[%c0_3, %c0_4] : memref<52x512xf32, #tpu.memory_space<vmem>>, vector<52x512xf32>
    %cst = arith.constant dense<0.000000e+00> : vector<8x512xf32>
    %3 = tpu.matmul %0, %2, %cst {dimension_numbers = #tpu.dot_dimension_numbers<[1], [0], [0], [1], [0, 0, 1, 1], [], []>} : vector<8x52xf32>, vector<52x512xf32>, vector<8x512xf32> -> vector<8x512xf32>
    %c0_5 = arith.constant 0 : index
    %c0_6 = arith.constant 0 : index
    %4 = vector.load %arg3[%c0_5, %c0_6] : memref<2x512xf32, #tpu.memory_space<vmem>>, vector<2x512xf32>
    %cst_7 = arith.constant dense<0.000000e+00> : vector<8x512xf32>
    %5 = tpu.matmul %1, %4, %cst_7 {dimension_numbers = #tpu.dot_dimension_numbers<[1], [0], [0], [1], [0, 0, 1, 1], [], []>} : vector<8x2xf32>, vector<2x512xf32>, vector<8x512xf32> -> vector<8x512xf32>
    %6 = arith.addf %3, %5 : vector<8x512xf32>
    %c0_8 = arith.constant 0 : index
    %c0_9 = arith.constant 0 : index
    %7 = vector.load %arg4[%c0_8, %c0_9] : memref<1x512xf32, #tpu.memory_space<vmem>>, vector<1x512xf32>
    %8 = vector.broadcast %7 : vector<1x512xf32> to vector<8x512xf32>
    %9 = arith.addf %6, %8 : vector<8x512xf32>
    %cst_10 = arith.constant 0.000000e+00 : f32
    %10 = vector.broadcast %cst_10 : f32 to vector<8x512xf32>
    %11 = arith.maximumf %9, %10 : vector<8x512xf32>
    %12 = vector.extract_strided_slice %11 {offsets = [0, 0], sizes = [8, 256], strides = [1, 1]} : vector<8x512xf32> to vector<8x256xf32>
    %c0_11 = arith.constant 0 : index
    %c0_12 = arith.constant 0 : index
    %13 = vector.load %arg5[%c0_11, %c0_12] : memref<256x256xf32, #tpu.memory_space<vmem>>, vector<256x256xf32>
    %cst_13 = arith.constant dense<0.000000e+00> : vector<8x256xf32>
    %14 = tpu.matmul %12, %13, %cst_13 {dimension_numbers = #tpu.dot_dimension_numbers<[1], [0], [0], [1], [0, 0, 1, 1], [], []>} : vector<8x256xf32>, vector<256x256xf32>, vector<8x256xf32> -> vector<8x256xf32>
    %c0_14 = arith.constant 0 : index
    %c0_15 = arith.constant 0 : index
    %15 = vector.load %arg6[%c0_14, %c0_15] : memref<1x256xf32, #tpu.memory_space<vmem>>, vector<1x256xf32>
    %16 = vector.broadcast %15 : vector<1x256xf32> to vector<8x256xf32>
    %17 = arith.addf %14, %16 : vector<8x256xf32>
    %cst_16 = arith.constant 0.000000e+00 : f32
    %18 = vector.broadcast %cst_16 : f32 to vector<8x256xf32>
    %19 = arith.maximumf %17, %18 : vector<8x256xf32>
    %20 = vector.extract_strided_slice %11 {offsets = [0, 256], sizes = [8, 256], strides = [1, 1]} : vector<8x512xf32> to vector<8x256xf32>
    %c0_17 = arith.constant 0 : index
    %c0_18 = arith.constant 0 : index
    %21 = vector.load %arg7[%c0_17, %c0_18] : memref<256x256xf32, #tpu.memory_space<vmem>>, vector<256x256xf32>
    %cst_19 = arith.constant dense<0.000000e+00> : vector<8x256xf32>
    %22 = tpu.matmul %20, %21, %cst_19 {dimension_numbers = #tpu.dot_dimension_numbers<[1], [0], [0], [1], [0, 0, 1, 1], [], []>} : vector<8x256xf32>, vector<256x256xf32>, vector<8x256xf32> -> vector<8x256xf32>
    %c0_20 = arith.constant 0 : index
    %c0_21 = arith.constant 0 : index
    %23 = vector.load %arg8[%c0_20, %c0_21] : memref<1x256xf32, #tpu.memory_space<vmem>>, vector<1x256xf32>
    %24 = vector.broadcast %23 : vector<1x256xf32> to vector<8x256xf32>
    %25 = arith.addf %22, %24 : vector<8x256xf32>
    %cst_22 = arith.constant 0.000000e+00 : f32
    %26 = vector.broadcast %cst_22 : f32 to vector<8x256xf32>
    %27 = arith.maximumf %25, %26 : vector<8x256xf32>
    %c0_23 = arith.constant 0 : index
    %c0_24 = arith.constant 0 : index
    %28 = vector.load %arg9[%c0_23, %c0_24] : memref<512x2xf32, #tpu.memory_space<vmem>>, vector<256x2xf32>
    %cst_25 = arith.constant dense<0.000000e+00> : vector<8x2xf32>
    %29 = tpu.matmul %19, %28, %cst_25 {dimension_numbers = #tpu.dot_dimension_numbers<[1], [0], [0], [1], [0, 0, 1, 1], [], []>} : vector<8x256xf32>, vector<256x2xf32>, vector<8x2xf32> -> vector<8x2xf32>
    %c256 = arith.constant 256 : index
    %c0_26 = arith.constant 0 : index
    %30 = vector.load %arg9[%c256, %c0_26] : memref<512x2xf32, #tpu.memory_space<vmem>>, vector<256x2xf32>
    %cst_27 = arith.constant dense<0.000000e+00> : vector<8x2xf32>
    %31 = tpu.matmul %27, %30, %cst_27 {dimension_numbers = #tpu.dot_dimension_numbers<[1], [0], [0], [1], [0, 0, 1, 1], [], []>} : vector<8x256xf32>, vector<256x2xf32>, vector<8x2xf32> -> vector<8x2xf32>
    %32 = arith.addf %29, %31 : vector<8x2xf32>
    %c0_28 = arith.constant 0 : index
    %c0_29 = arith.constant 0 : index
    %33 = vector.load %arg10[%c0_28, %c0_29] : memref<1x2xf32, #tpu.memory_space<vmem>>, vector<1x2xf32>
    %34 = vector.broadcast %33 : vector<1x2xf32> to vector<8x2xf32>
    %35 = arith.addf %32, %34 : vector<8x2xf32>
    %c0_30 = arith.constant 0 : index
    %c0_31 = arith.constant 0 : index
    %36 = vector.load %arg11[%c0_30, %c0_31] : memref<8x2xf32, #tpu.memory_space<vmem>>, vector<8x2xf32>
    tpu.vector_store %arg11[%c0_30, %c0_31], %35 {strides = array<i32>} : memref<8x2xf32, #tpu.memory_space<vmem>>, vector<8x2xf32>,
    return
  }
}

</mosaic_0001>

<llo_original>
// kernel: tpu_custom_call.1
$region0: #{tpu_custom_call.1}
  #allocation0 [shape = 'u32[]', space=smem, size = 0x4, offset = 0x4, fixed_abs, tag = 'smem constant byte address 0x4 - core index']
  #allocation1 [shape = 'u32[144,128]{1,0:T(1,128)}', space=vmem, size = 0x12000, scoped, tag = 'internal scratch']
  %s0 = inlined_call_operand.vmem [shape: f32[8,52], index: 0, kind: input, shape index: {}]
  %s1 = inlined_call_operand.vmem [shape: f32[8,2], index: 1, kind: input, shape index: {}]
  %s2 = inlined_call_operand.hbm [shape: f32[52,512], index: 2, kind: input, shape index: {}]
  %s3 = inlined_call_operand.vmem [shape: f32[2,512], index: 3, kind: input, shape index: {}]
  %s4 = inlined_call_operand.vmem [shape: f32[1,512], index: 4, kind: input, shape index: {}]
  %s5 = inlined_call_operand.vmem [shape: f32[256,256], index: 5, kind: input, shape index: {}]
  %s6 = inlined_call_operand.hbm [shape: f32[1,256], index: 6, kind: input, shape index: {}]
  %s7 = inlined_call_operand.hbm [shape: f32[256,256], index: 7, kind: input, shape index: {}]
  %s8 = inlined_call_operand.hbm [shape: f32[1,256], index: 8, kind: input, shape index: {}]
  %s9 = inlined_call_operand.vmem [shape: f32[512,2], index: 9, kind: input, shape index: {}]
  %s10 = inlined_call_operand.vmem [shape: f32[1,2], index: 10, kind: input, shape index: {}]
  %s11 = inlined_call_operand.vmem [shape: f32[8,2], index: 11, kind: output, shape index: {}]
  %s12 = sld [smem:[#allocation0]]
  $region70: #{tpu_custom_call.1} parent=0
    _
  %s14 = ssub.s32 1, %s12
  %s15 = scalar_select 0, %s14, %s12
  $region1: #{tpu_custom_call.1} parent=0
    #allocation2 [shape = 'u8[114688]{0}', space=vmem, size = 0x1c000, scoped, tag = 'input window, operand 2, single buffered']
    #allocation3 [shape = 's32[1]{0}', space=sflag, size = 0x4, scoped, tag = 'scoped memory for tpu_custom_call.1']
    #allocation4 [shape = 'u8[1024]{0}', space=vmem, size = 0x400, scoped, tag = 'input window, operand 6, single buffered']
    #allocation5 [shape = 's32[1]{0}', space=sflag, size = 0x4, scoped, tag = 'scoped memory for tpu_custom_call.1']
    #allocation6 [shape = 'u8[262144]{0}', space=vmem, size = 0x40000, scoped, tag = 'input window, operand 7, single buffered']
    #allocation7 [shape = 'u8[1024]{0}', space=vmem, size = 0x400, scoped, tag = 'input window, operand 8, single buffered']
    #allocation8 [shape = 's32[1]{0}', space=sflag, size = 0x4, scoped, tag = 'scoped memory for tpu_custom_call.1']
    %16 = vsyncpa [#allocation3], 0
    %17 = vsyncpa [#allocation5], 0
    %18 = vsyncpa [#allocation8], 0
    // Predicated region
    $region2: #{tpu_custom_call.1} parent=1 // pred_check
      _
    $region3: #{tpu_custom_call.1} parent=1 // pred_check_branch
      %20 = sbr.rel (0) target = $region5
    $region4: #{tpu_custom_call.1} parent=1 // pred_region
      _
    $region5: #{tpu_custom_call.1} parent=1 // pred_fallthru
      _
    // Predicated region
    $region6: #{tpu_custom_call.1} parent=1 // pred_check
      _
    $region7: #{tpu_custom_call.1} parent=1 // pred_check_branch
      %22 = sbr.rel (0) target = $region9
    $region8: #{tpu_custom_call.1} parent=1 // pred_region
      _
    $region9: #{tpu_custom_call.1} parent=1 // pred_fallthru
      _
    // Predicated region
    $region10: #{tpu_custom_call.1} parent=1 // pred_check
      _
    $region11: #{tpu_custom_call.1} parent=1 // pred_check_branch
      %24 = sbr.rel (0) target = $region13
    $region12: #{tpu_custom_call.1} parent=1 // pred_region
      %s26 = ssub.s32 3584, 3584
      %27 = vsyncadd [#allocation3], %s26
      %s28 = sshll.u32 [#allocation2], 4
      %s29 = int_to_ptr.vmem [resolvable:$true] %s28
      %34 = dma.hbm_to_vmem [thread:$0]  %s2, 3584, %s29, [#allocation3], 512, 512, 32
    $region13: #{tpu_custom_call.1} parent=1 // pred_fallthru
      _
    // Predicated region
    $region14: #{tpu_custom_call.1} parent=1 // pred_check
      _
    $region15: #{tpu_custom_call.1} parent=1 // pred_check_branch
      %36 = sbr.rel (0) target = $region17
    $region16: #{tpu_custom_call.1} parent=1 // pred_region
      _
    $region17: #{tpu_custom_call.1} parent=1 // pred_fallthru
      _
    // Predicated region
    $region18: #{tpu_custom_call.1} parent=1 // pred_check
      _
    $region19: #{tpu_custom_call.1} parent=1 // pred_check_branch
      %38 = sbr.rel (0) target = $region21
    $region20: #{tpu_custom_call.1} parent=1 // pred_region
      _
    $region21: #{tpu_custom_call.1} parent=1 // pred_fallthru
      _
    // Predicated region
    $region22: #{tpu_custom_call.1} parent=1 // pred_check
      _
    $region23: #{tpu_custom_call.1} parent=1 // pred_check_branch
      %40 = sbr.rel (0) target = $region25
    $region24: #{tpu_custom_call.1} parent=1 // pred_region
      _
    $region25: #{tpu_custom_call.1} parent=1 // pred_fallthru
      _
    // Predicated region
    $region26: #{tpu_custom_call.1} parent=1 // pred_check
      _
    $region27: #{tpu_custom_call.1} parent=1 // pred_check_branch
      %42 = sbr.rel (0) target = $region29
    $region28: #{tpu_custom_call.1} parent=1 // pred_region
      %s44 = ssub.s32 32, 32
      %45 = vsyncadd [#allocation5], %s44
      %s47 = sshll.u32 [#allocation4], 4
      %s48 = int_to_ptr.vmem [resolvable:$true] %s47
      %50 = dma.hbm_to_vmem [thread:$0]  %s6, 32, %s48, [#allocation5]
    $region29: #{tpu_custom_call.1} parent=1 // pred_fallthru
      _
    // Predicated region
    $region30: #{tpu_custom_call.1} parent=1 // pred_check
      _
    $region31: #{tpu_custom_call.1} parent=1 // pred_check_branch
      %52 = sbr.rel (0) target = $region33
    $region32: #{tpu_custom_call.1} parent=1 // pred_region
      %s54 = ssub.s32 8192, 8192
      %55 = vsyncadd [#allocation5], %s54
      %s56 = sshll.u32 [#allocation6], 4
      %s57 = int_to_ptr.vmem [resolvable:$true] %s56
      %62 = dma.hbm_to_vmem [thread:$0]  %s7, 8192, %s57, [#allocation5], 256, 256, 16
    $region33: #{tpu_custom_call.1} parent=1 // pred_fallthru
      _
    // Predicated region
    $region34: #{tpu_custom_call.1} parent=1 // pred_check
      _
    $region35: #{tpu_custom_call.1} parent=1 // pred_check_branch
      %64 = sbr.rel (0) target = $region37
    $region36: #{tpu_custom_call.1} parent=1 // pred_region
      %s66 = ssub.s32 32, 32
      %67 = vsyncadd [#allocation8], %s66
      %s69 = sshll.u32 [#allocation7], 4
      %s70 = int_to_ptr.vmem [resolvable:$true] %s69
      %72 = dma.hbm_to_vmem [thread:$0]  %s8, 32, %s70, [#allocation8]
    $region37: #{tpu_custom_call.1} parent=1 // pred_fallthru
      _
    // Predicated region
    $region38: #{tpu_custom_call.1} parent=1 // pred_check
      _
    $region39: #{tpu_custom_call.1} parent=1 // pred_check_branch
      %74 = sbr.rel (0) target = $region41
    $region40: #{tpu_custom_call.1} parent=1 // pred_region
      _
    $region41: #{tpu_custom_call.1} parent=1 // pred_fallthru
      _
    // Predicated region
    $region42: #{tpu_custom_call.1} parent=1 // pred_check
      _
    $region43: #{tpu_custom_call.1} parent=1 // pred_check_branch
      %76 = sbr.rel (0) target = $region45
    $region44: #{tpu_custom_call.1} parent=1 // pred_region
      _
    $region45: #{tpu_custom_call.1} parent=1 // pred_fallthru
      _
    // Predicated region
    $region46: #{tpu_custom_call.1} parent=1 // pred_check
      _
    $region47: #{tpu_custom_call.1} parent=1 // pred_check_branch
      %78 = sbr.rel (0) target = $region49
    $region48: #{tpu_custom_call.1} parent=1 // pred_region
      %79 = dma.done [#allocation3], 3584
    $region49: #{tpu_custom_call.1} parent=1 // pred_fallthru
      _
    // Predicated region
    $region50: #{tpu_custom_call.1} parent=1 // pred_check
      _
    $region51: #{tpu_custom_call.1} parent=1 // pred_check_branch
      %81 = sbr.rel (0) target = $region53
    $region52: #{tpu_custom_call.1} parent=1 // pred_region
      %82 = dma.done [#allocation5], 32
    $region53: #{tpu_custom_call.1} parent=1 // pred_fallthru
      _
    // Predicated region
    $region54: #{tpu_custom_call.1} parent=1 // pred_check
      _
    $region55: #{tpu_custom_call.1} parent=1 // pred_check_branch
      %84 = sbr.rel (0) target = $region57
    $region56: #{tpu_custom_call.1} parent=1 // pred_region
      %85 = dma.done [#allocation5], 8192
    $region57: #{tpu_custom_call.1} parent=1 // pred_fallthru
      _
    // Predicated region
    $region58: #{tpu_custom_call.1} parent=1 // pred_check
      _
    $region59: #{tpu_custom_call.1} parent=1 // pred_check_branch
      %87 = sbr.rel (0) target = $region61
    $region60: #{tpu_custom_call.1} parent=1 // pred_region
      %88 = dma.done [#allocation8], 32
    $region61: #{tpu_custom_call.1} parent=1 // pred_fallthru
      _
    %v89 = vld [vmem:[%s0] sm:$0xff]
    %v90 = vld [vmem:[%s1] sm:$0xff]
    %v91 = vld [vmem:[#allocation2] sm:$0xff]
    %v92 = vld [vmem:[#allocation2 + $0x8] sm:$0xff]
    %v93 = vld [vmem:[#allocation2 + $0x10] sm:$0xff]
    %v94 = vld [vmem:[#allocation2 + $0x18] sm:$0xff]
    %v95 = vld [vmem:[#allocation2 + $0x20] sm:$0xff]
    %v96 = vld [vmem:[#allocation2 + $0x28] sm:$0xff]
    %v97 = vld [vmem:[#allocation2 + $0x30] sm:$0xff]
    %v98 = vld [vmem:[#allocation2 + $0x38] sm:$0xff]
    %v99 = vld [vmem:[#allocation2 + $0x40] sm:$0xff]
    %v100 = vld [vmem:[#allocation2 + $0x48] sm:$0xff]
    %v101 = vld [vmem:[#allocation2 + $0x50] sm:$0xff]
    %v102 = vld [vmem:[#allocation2 + $0x58] sm:$0xff]
    %v103 = vld [vmem:[#allocation2 + $0x60] sm:$0xff]
    %v104 = vld [vmem:[#allocation2 + $0x68] sm:$0xff]
    %v105 = vld [vmem:[#allocation2 + $0x70] sm:$0xff]
    %v106 = vld [vmem:[#allocation2 + $0x78] sm:$0xff]
    %v107 = vld [vmem:[#allocation2 + $0x80] sm:$0xff]
    %v108 = vld [vmem:[#allocation2 + $0x88] sm:$0xff]
    %v109 = vld [vmem:[#allocation2 + $0x90] sm:$0xff]
    %v110 = vld [vmem:[#allocation2 + $0x98] sm:$0xff]
    %v111 = vld [vmem:[#allocation2 + $0xa0] sm:$0xff]
    %v112 = vld [vmem:[#allocation2 + $0xa8] sm:$0xff]
    %v113 = vld [vmem:[#allocation2 + $0xb0] sm:$0xff]
    %v114 = vld [vmem:[#allocation2 + $0xb8] sm:$0xff]
    %v115 = vld [vmem:[#allocation2 + $0xc0] sm:$0xf]
    %v116 = vld [vmem:[#allocation2 + $0xc8] sm:$0xf]
    %v117 = vld [vmem:[#allocation2 + $0xd0] sm:$0xf]
    %v118 = vld [vmem:[#allocation2 + $0xd8] sm:$0xf]
    %v119 = vld [vmem:[%s3] sm:$0xff]
    %v121 = vcombine.high %v119, %v119
    %v123 = vunpack.c.l.s4 1983009808
    %v124 = vunpack.c.0.s8 %v123
    %v125 = vlaneseq
    %v126 = vshrl.u32 %v125, 7
    %v127 = vsub.s32 %v124, %v126
    %v128 = vrot.slane %v119, %v127
    %v130 = vunpack.c.l.s4 1983009808
    %v131 = vunpack.c.0.s8 %v130
    %v132 = vlaneseq
    %v133 = vshrl.u32 %v132, 7
    %v134 = vsub.s32 %v131, %v133
    %v135 = vrot.slane %v121, %v134
    %v136 = vcombine.high %v128, %v128
    %v137 = vcombine.high %v135, %v135
    %vm138 = vcmask 15360
    %v140 = vsel %vm138, %v90, 0
    %vm142 = vcmask 1041408
    %v143 = vsel %vm142, %v128, 0
    %v145 = vsel %vm142, %v136, 0
    %v147 = vsel %vm142, %v135, 0
    %v149 = vsel %vm142, %v137, 0
    %151 = vmatprep.subr.mxu0 0.0
    %152 = vmatpush1.msra.mxu0 0.0
    %153 = vmatprep.subr.mxu0 0.0
    %154 = vmatpush1.msra.mxu0 0.0
    %155 = vmatprep.subr.mxu0 0.0
    %156 = vmatpush1.msra.mxu0 0.0
    %157 = vmatprep.subr.mxu0 0.0
    %158 = vmatpush1.msra.mxu0 0.0
    %159 = vmatprep.subr.mxu0 0.0
    %160 = vmatpush1.msra.mxu0 0.0
    %161 = vmatprep.subr.mxu0 0.0
    %162 = vmatpush1.msra.mxu0 0.0
    %163 = vmatprep.subr.mxu0 0.0
    %164 = vmatpush1.msra.mxu0 0.0
    %165 = vmatprep.subr.mxu0 0.0
    %166 = vmatpush1.msra.mxu0 0.0
    %167 = vmatprep.subr.mxu0 0.0
    %168 = vmatpush1.msra.mxu0 0.0
    %169 = vmatprep.subr.mxu0 0.0
    %170 = vmatpush1.msra.mxu0 0.0
    %171 = vmatprep.subr.mxu0 0.0
    %172 = vmatpush1.msra.mxu0 0.0
    %173 = vmatprep.subr.mxu0 0.0
    %174 = vmatpush1.msra.mxu0 0.0
    %175 = vmatprep.subr.mxu0 0.0
    %176 = vmatpush1.msra.mxu0 0.0
    %177 = vmatprep.subr.mxu0 0.0
    %178 = vmatpush1.msra.mxu0 0.0
    %179 = vmatprep.subr.mxu0 0.0
    %180 = vmatpush1.msra.mxu0 0.0
    %181 = vmatprep.subr.mxu0 %v145
    %182 = vmatpush1.msra.mxu0 %v143
    %183 = vmatprep.subr.mxu0 0.0
    %184 = vmatpush2.msra.mxu0 0.0
    %185 = vmatprep.subr.mxu0 0.0
    %186 = vmatpush2.msra.mxu0 0.0
    %187 = vmatprep.subr.mxu0 0.0
    %188 = vmatpush2.msra.mxu0 0.0
    %189 = vmatprep.subr.mxu0 0.0
    %190 = vmatpush2.msra.mxu0 0.0
    %191 = vmatprep.subr.mxu0 0.0
    %192 = vmatpush2.msra.mxu0 0.0
    %193 = vmatprep.subr.mxu0 0.0
    %194 = vmatpush2.msra.mxu0 0.0
    %195 = vmatprep.subr.mxu0 0.0
    %196 = vmatpush2.msra.mxu0 0.0
    %197 = vmatprep.subr.mxu0 0.0
    %198 = vmatpush2.msra.mxu0 0.0
    %199 = vmatprep.subr.mxu0 0.0
    %200 = vmatpush2.msra.mxu0 0.0
    %201 = vmatprep.subr.mxu0 0.0
    %202 = vmatpush2.msra.mxu0 0.0
    %203 = vmatprep.subr.mxu0 0.0
    %204 = vmatpush2.msra.mxu0 0.0
    %205 = vmatprep.subr.mxu0 0.0
    %206 = vmatpush2.msra.mxu0 0.0
    %207 = vmatprep.subr.mxu0 0.0
    %208 = vmatpush2.msra.mxu0 0.0
    %209 = vmatprep.subr.mxu0 0.0
    %210 = vmatpush2.msra.mxu0 0.0
    %211 = vmatprep.subr.mxu0 0.0
    %212 = vmatpush2.msra.mxu0 0.0
    %213 = vmatprep.subr.mxu0 0.0
    %214 = vmatpush2.msra.mxu0 0.0
    %215 = vmatprep.mubr.f32.mxu0 0.0
    %216 = vmatmul.mubr.f32.gmra.mxu0 %v140
    %v217 = vpop.f32.mrf.mxu0
    %v218 = vadd.f32 0.0, %v217
    %v219 = vpop.f32.mrf.mxu0
    %v220 = vadd.f32 0.0, %v219
    %221 = vdwg.mxu0
    %222 = vmatprep.subr.mxu0 0.0
    %223 = vmatpush1.msra.mxu0 0.0
    %224 = vmatprep.subr.mxu0 0.0
    %225 = vmatpush1.msra.mxu0 0.0
    %226 = vmatprep.subr.mxu0 0.0
    %227 = vmatpush1.msra.mxu0 0.0
    %228 = vmatprep.subr.mxu0 0.0
    %229 = vmatpush1.msra.mxu0 0.0
    %230 = vmatprep.subr.mxu0 0.0
    %231 = vmatpush1.msra.mxu0 0.0
    %232 = vmatprep.subr.mxu0 0.0
    %233 = vmatpush1.msra.mxu0 0.0
    %234 = vmatprep.subr.mxu0 0.0
    %235 = vmatpush1.msra.mxu0 0.0
    %236 = vmatprep.subr.mxu0 0.0
    %237 = vmatpush1.msra.mxu0 0.0
    %238 = vmatprep.subr.mxu0 0.0
    %239 = vmatpush1.msra.mxu0 0.0
    %240 = vmatprep.subr.mxu0 0.0
    %241 = vmatpush1.msra.mxu0 0.0
    %242 = vmatprep.subr.mxu0 0.0
    %243 = vmatpush1.msra.mxu0 0.0
    %244 = vmatprep.subr.mxu0 0.0
    %245 = vmatpush1.msra.mxu0 0.0
    %246 = vmatprep.subr.mxu0 0.0
    %247 = vmatpush1.msra.mxu0 0.0
    %248 = vmatprep.subr.mxu0 0.0
    %249 = vmatpush1.msra.mxu0 0.0
    %250 = vmatprep.subr.mxu0 0.0
    %251 = vmatpush1.msra.mxu0 0.0
    %252 = vmatprep.subr.mxu0 %v149
    %253 = vmatpush1.msra.mxu0 %v147
    %254 = vmatprep.subr.mxu0 0.0
    %255 = vmatpush2.msra.mxu0 0.0
    %256 = vmatprep.subr.mxu0 0.0
    %257 = vmatpush2.msra.mxu0 0.0
    %258 = vmatprep.subr.mxu0 0.0
    %259 = vmatpush2.msra.mxu0 0.0
    %260 = vmatprep.subr.mxu0 0.0
    %261 = vmatpush2.msra.mxu0 0.0
    %262 = vmatprep.subr.mxu0 0.0
    %263 = vmatpush2.msra.mxu0 0.0
    %264 = vmatprep.subr.mxu0 0.0
    %265 = vmatpush2.msra.mxu0 0.0
    %266 = vmatprep.subr.mxu0 0.0
    %267 = vmatpush2.msra.mxu0 0.0
    %268 = vmatprep.subr.mxu0 0.0
    %269 = vmatpush2.msra.mxu0 0.0
    %270 = vmatprep.subr.mxu0 0.0
    %271 = vmatpush2.msra.mxu0 0.0
    %272 = vmatprep.subr.mxu0 0.0
    %273 = vmatpush2.msra.mxu0 0.0
    %274 = vmatprep.subr.mxu0 0.0
    %275 = vmatpush2.msra.mxu0 0.0
    %276 = vmatprep.subr.mxu0 0.0
    %277 = vmatpush2.msra.mxu0 0.0
    %278 = vmatprep.subr.mxu0 0.0
    %279 = vmatpush2.msra.mxu0 0.0
    %280 = vmatprep.subr.mxu0 0.0
    %281 = vmatpush2.msra.mxu0 0.0
    %282 = vmatprep.subr.mxu0 0.0
    %283 = vmatpush2.msra.mxu0 0.0
    %284 = vmatprep.subr.mxu0 0.0
    %285 = vmatpush2.msra.mxu0 0.0
    %286 = vmatprep.mubr.f32.mxu0 0.0
    %287 = vmatmul.mubr.f32.gmra.mxu0 %v140
    %v288 = vpop.f32.mrf.mxu0
    %v289 = vadd.f32 0.0, %v288
    %v290 = vpop.f32.mrf.mxu0
    %v291 = vadd.f32 0.0, %v290
    %292 = vdwg.mxu0
    %vm293 = vcmask 424960
    %v295 = vsel %vm293, %v89, 0
    %vm297 = vcmask 1043456
    %v299 = vsel %vm297, %v115, 0
    %v302 = vsel %vm297, %v116, 0
    %v305 = vsel %vm297, %v117, 0
    %v308 = vsel %vm297, %v118, 0
    %310 = vmatprep.subr.mxu0 0.0
    %311 = vmatpush1.msra.mxu0 0.0
    %312 = vmatprep.subr.mxu0 0.0
    %313 = vmatpush1.msra.mxu0 0.0
    %314 = vmatprep.subr.mxu0 0.0
    %315 = vmatpush1.msra.mxu0 0.0
    %316 = vmatprep.subr.mxu0 0.0
    %317 = vmatpush1.msra.mxu0 0.0
    %318 = vmatprep.subr.mxu0 0.0
    %319 = vmatpush1.msra.mxu0 0.0
    %320 = vmatprep.subr.mxu0 0.0
    %321 = vmatpush1.msra.mxu0 0.0
    %322 = vmatprep.subr.mxu0 0.0
    %323 = vmatpush1.msra.mxu0 0.0
    %324 = vmatprep.subr.mxu0 0.0
    %325 = vmatpush1.msra.mxu0 0.0
    %326 = vmatprep.subr.mxu0 0.0
    %327 = vmatpush1.msra.mxu0 0.0
    %328 = vmatprep.subr.mxu0 %v302
    %329 = vmatpush1.msra.mxu0 %v299
    %330 = vmatprep.subr.mxu0 %v112
    %331 = vmatpush1.msra.mxu0 %v111
    %332 = vmatprep.subr.mxu0 %v108
    %333 = vmatpush1.msra.mxu0 %v107
    %334 = vmatprep.subr.mxu0 %v104
    %335 = vmatpush1.msra.mxu0 %v103
    %336 = vmatprep.subr.mxu0 %v100
    %337 = vmatpush1.msra.mxu0 %v99
    %338 = vmatprep.subr.mxu0 %v96
    %339 = vmatpush1.msra.mxu0 %v95
    %340 = vmatprep.subr.mxu0 %v92
    %341 = vmatpush1.msra.mxu0 %v91
    %342 = vmatprep.subr.mxu0 0.0
    %343 = vmatpush2.msra.mxu0 0.0
    %344 = vmatprep.subr.mxu0 0.0
    %345 = vmatpush2.msra.mxu0 0.0
    %346 = vmatprep.subr.mxu0 0.0
    %347 = vmatpush2.msra.mxu0 0.0
    %348 = vmatprep.subr.mxu0 0.0
    %349 = vmatpush2.msra.mxu0 0.0
    %350 = vmatprep.subr.mxu0 0.0
    %351 = vmatpush2.msra.mxu0 0.0
    %352 = vmatprep.subr.mxu0 0.0
    %353 = vmatpush2.msra.mxu0 0.0
    %354 = vmatprep.subr.mxu0 0.0
    %355 = vmatpush2.msra.mxu0 0.0
    %356 = vmatprep.subr.mxu0 0.0
    %357 = vmatpush2.msra.mxu0 0.0
    %358 = vmatprep.subr.mxu0 0.0
    %359 = vmatpush2.msra.mxu0 0.0
    %360 = vmatprep.subr.mxu0 0.0
    %361 = vmatpush2.msra.mxu0 0.0
    %362 = vmatprep.subr.mxu0 0.0
    %363 = vmatpush2.msra.mxu0 0.0
    %364 = vmatprep.subr.mxu0 0.0
    %365 = vmatpush2.msra.mxu0 0.0
    %366 = vmatprep.subr.mxu0 0.0
    %367 = vmatpush2.msra.mxu0 0.0
    %368 = vmatprep.subr.mxu0 0.0
    %369 = vmatpush2.msra.mxu0 0.0
    %370 = vmatprep.subr.mxu0 0.0
    %371 = vmatpush2.msra.mxu0 0.0
    %372 = vmatprep.subr.mxu0 0.0
    %373 = vmatpush2.msra.mxu0 0.0
    %374 = vmatprep.mubr.f32.mxu0 0.0
    %375 = vmatmul.mubr.f32.gmra.mxu0 %v295
    %v376 = vpop.f32.mrf.mxu0
    %v377 = vadd.f32 %v218, %v376
    %v378 = vpop.f32.mrf.mxu0
    %v379 = vadd.f32 %v220, %v378
    %380 = vdwg.mxu0
    %381 = vmatprep.subr.mxu0 0.0
    %382 = vmatpush1.msra.mxu0 0.0
    %383 = vmatprep.subr.mxu0 0.0
    %384 = vmatpush1.msra.mxu0 0.0
    %385 = vmatprep.subr.mxu0 0.0
    %386 = vmatpush1.msra.mxu0 0.0
    %387 = vmatprep.subr.mxu0 0.0
    %388 = vmatpush1.msra.mxu0 0.0
    %389 = vmatprep.subr.mxu0 0.0
    %390 = vmatpush1.msra.mxu0 0.0
    %391 = vmatprep.subr.mxu0 0.0
    %392 = vmatpush1.msra.mxu0 0.0
    %393 = vmatprep.subr.mxu0 0.0
    %394 = vmatpush1.msra.mxu0 0.0
    %395 = vmatprep.subr.mxu0 0.0
    %396 = vmatpush1.msra.mxu0 0.0
    %397 = vmatprep.subr.mxu0 0.0
    %398 = vmatpush1.msra.mxu0 0.0
    %399 = vmatprep.subr.mxu0 %v308
    %400 = vmatpush1.msra.mxu0 %v305
    %401 = vmatprep.subr.mxu0 %v114
    %402 = vmatpush1.msra.mxu0 %v113
    %403 = vmatprep.subr.mxu0 %v110
    %404 = vmatpush1.msra.mxu0 %v109
    %405 = vmatprep.subr.mxu0 %v106
    %406 = vmatpush1.msra.mxu0 %v105
    %407 = vmatprep.subr.mxu0 %v102
    %408 = vmatpush1.msra.mxu0 %v101
    %409 = vmatprep.subr.mxu0 %v98
    %410 = vmatpush1.msra.mxu0 %v97
    %411 = vmatprep.subr.mxu0 %v94
    %412 = vmatpush1.msra.mxu0 %v93
    %413 = vmatprep.subr.mxu0 0.0
    %414 = vmatpush2.msra.mxu0 0.0
    %415 = vmatprep.subr.mxu0 0.0
    %416 = vmatpush2.msra.mxu0 0.0
    %417 = vmatprep.subr.mxu0 0.0
    %418 = vmatpush2.msra.mxu0 0.0
    %419 = vmatprep.subr.mxu0 0.0
    %420 = vmatpush2.msra.mxu0 0.0
    %421 = vmatprep.subr.mxu0 0.0
    %422 = vmatpush2.msra.mxu0 0.0
    %423 = vmatprep.subr.mxu0 0.0
    %424 = vmatpush2.msra.mxu0 0.0
    %425 = vmatprep.subr.mxu0 0.0
    %426 = vmatpush2.msra.mxu0 0.0
    %427 = vmatprep.subr.mxu0 0.0
    %428 = vmatpush2.msra.mxu0 0.0
    %429 = vmatprep.subr.mxu0 0.0
    %430 = vmatpush2.msra.mxu0 0.0
    %431 = vmatprep.subr.mxu0 0.0
    %432 = vmatpush2.msra.mxu0 0.0
    %433 = vmatprep.subr.mxu0 0.0
    %434 = vmatpush2.msra.mxu0 0.0
    %435 = vmatprep.subr.mxu0 0.0
    %436 = vmatpush2.msra.mxu0 0.0
    %437 = vmatprep.subr.mxu0 0.0
    %438 = vmatpush2.msra.mxu0 0.0
    %439 = vmatprep.subr.mxu0 0.0
    %440 = vmatpush2.msra.mxu0 0.0
    %441 = vmatprep.subr.mxu0 0.0
    %442 = vmatpush2.msra.mxu0 0.0
    %443 = vmatprep.subr.mxu0 0.0
    %444 = vmatpush2.msra.mxu0 0.0
    %445 = vmatprep.mubr.f32.mxu0 0.0
    %446 = vmatmul.mubr.f32.gmra.mxu0 %v295
    %v447 = vpop.f32.mrf.mxu0
    %v448 = vadd.f32 %v289, %v447
    %v449 = vpop.f32.mrf.mxu0
    %v450 = vadd.f32 %v291, %v449
    %451 = vdwg.mxu0
    %v452 = vld [vmem:[%s4] sm:$0xf]
    %v454 = vlaneseq
    %v455 = vshrl.u32 %v454, 7
    %v456 = vsub.s32 0, %v455
    %v457 = vrot.slane %v452, %v456
    %v458 = vlaneseq
    %v459 = vshrl.u32 %v458, 7
    %v460 = vsub.s32 1, %v459
    %v461 = vrot.slane %v452, %v460
    %v462 = vlaneseq
    %v463 = vshrl.u32 %v462, 7
    %v464 = vsub.s32 2, %v463
    %v465 = vrot.slane %v452, %v464
    %v466 = vlaneseq
    %v467 = vshrl.u32 %v466, 7
    %v468 = vsub.s32 3, %v467
    %v469 = vrot.slane %v452, %v468
    %v474 = vadd.f32 %v377, %v457
    %v475 = vadd.f32 %v379, %v461
    %v476 = vadd.f32 %v448, %v465
    %v477 = vadd.f32 %v450, %v469
    %v478 = vmax.f32 %v474, 0.0
    %v479 = vmax.f32 %v475, 0.0
    %v480 = vmax.f32 %v476, 0.0
    %v481 = vmax.f32 %v477, 0.0
    %v482 = vld [vmem:[%s5] sm:$0xff]
    %v483 = vld [vmem:[%s5 + $0x8] sm:$0xff]
    %v484 = vld [vmem:[%s5 + $0x10] sm:$0xff]
    %v485 = vld [vmem:[%s5 + $0x18] sm:$0xff]
    %v486 = vld [vmem:[%s5 + $0x20] sm:$0xff]
    %v487 = vld [vmem:[%s5 + $0x28] sm:$0xff]
    %v488 = vld [vmem:[%s5 + $0x30] sm:$0xff]
    %v489 = vld [vmem:[%s5 + $0x38] sm:$0xff]
    %v490 = vld [vmem:[%s5 + $0x40] sm:$0xff]
    %v491 = vld [vmem:[%s5 + $0x48] sm:$0xff]
    %v492 = vld [vmem:[%s5 + $0x50] sm:$0xff]
    %v493 = vld [vmem:[%s5 + $0x58] sm:$0xff]
    %v494 = vld [vmem:[%s5 + $0x60] sm:$0xff]
    %v495 = vld [vmem:[%s5 + $0x68] sm:$0xff]
    %v496 = vld [vmem:[%s5 + $0x70] sm:$0xff]
    %v497 = vld [vmem:[%s5 + $0x78] sm:$0xff]
    %v498 = vld [vmem:[%s5 + $0x80] sm:$0xff]
    %v499 = vld [vmem:[%s5 + $0x88] sm:$0xff]
    %v500 = vld [vmem:[%s5 + $0x90] sm:$0xff]
    %v501 = vld [vmem:[%s5 + $0x98] sm:$0xff]
    %v502 = vld [vmem:[%s5 + $0xa0] sm:$0xff]
    %v503 = vld [vmem:[%s5 + $0xa8] sm:$0xff]
    %v504 = vld [vmem:[%s5 + $0xb0] sm:$0xff]
    %v505 = vld [vmem:[%s5 + $0xb8] sm:$0xff]
    %v506 = vld [vmem:[%s5 + $0xc0] sm:$0xff]
    %v507 = vld [vmem:[%s5 + $0xc8] sm:$0xff]
    %v508 = vld [vmem:[%s5 + $0xd0] sm:$0xff]
    %v509 = vld [vmem:[%s5 + $0xd8] sm:$0xff]
    %v510 = vld [vmem:[%s5 + $0xe0] sm:$0xff]
    %v511 = vld [vmem:[%s5 + $0xe8] sm:$0xff]
    %v512 = vld [vmem:[%s5 + $0xf0] sm:$0xff]
    %v513 = vld [vmem:[%s5 + $0xf8] sm:$0xff]
    %v514 = vld [vmem:[%s5 + $0x100] sm:$0xff]
    %v515 = vld [vmem:[%s5 + $0x108] sm:$0xff]
    %v516 = vld [vmem:[%s5 + $0x110] sm:$0xff]
    %v517 = vld [vmem:[%s5 + $0x118] sm:$0xff]
    %v518 = vld [vmem:[%s5 + $0x120] sm:$0xff]
    %v519 = vld [vmem:[%s5 + $0x128] sm:$0xff]
    %v520 = vld [vmem:[%s5 + $0x130] sm:$0xff]
    %v521 = vld [vmem:[%s5 + $0x138] sm:$0xff]
    %v522 = vld [vmem:[%s5 + $0x140] sm:$0xff]
    %v523 = vld [vmem:[%s5 + $0x148] sm:$0xff]
    %v524 = vld [vmem:[%s5 + $0x150] sm:$0xff]
    %v525 = vld [vmem:[%s5 + $0x158] sm:$0xff]
    %v526 = vld [vmem:[%s5 + $0x160] sm:$0xff]
    %v527 = vld [vmem:[%s5 + $0x168] sm:$0xff]
    %v528 = vld [vmem:[%s5 + $0x170] sm:$0xff]
    %v529 = vld [vmem:[%s5 + $0x178] sm:$0xff]
    %v530 = vld [vmem:[%s5 + $0x180] sm:$0xff]
    %v531 = vld [vmem:[%s5 + $0x188] sm:$0xff]
    %v532 = vld [vmem:[%s5 + $0x190] sm:$0xff]
    %v533 = vld [vmem:[%s5 + $0x198] sm:$0xff]
    %v534 = vld [vmem:[%s5 + $0x1a0] sm:$0xff]
    %v535 = vld [vmem:[%s5 + $0x1a8] sm:$0xff]
    %v536 = vld [vmem:[%s5 + $0x1b0] sm:$0xff]
    %v537 = vld [vmem:[%s5 + $0x1b8] sm:$0xff]
    %v538 = vld [vmem:[%s5 + $0x1c0] sm:$0xff]
    %v539 = vld [vmem:[%s5 + $0x1c8] sm:$0xff]
    %v540 = vld [vmem:[%s5 + $0x1d0] sm:$0xff]
    %v541 = vld [vmem:[%s5 + $0x1d8] sm:$0xff]
    %v542 = vld [vmem:[%s5 + $0x1e0] sm:$0xff]
    %v543 = vld [vmem:[%s5 + $0x1e8] sm:$0xff]
    %v544 = vld [vmem:[%s5 + $0x1f0] sm:$0xff]
    %v545 = vld [vmem:[%s5 + $0x1f8] sm:$0xff]
    %v546 = vld [vmem:[#allocation4] sm:$0x3]
    %v548 = vlaneseq
    %v549 = vshrl.u32 %v548, 7
    %v550 = vsub.s32 0, %v549
    %v551 = vrot.slane %v546, %v550
    %v552 = vlaneseq
    %v553 = vshrl.u32 %v552, 7
    %v554 = vsub.s32 1, %v553
    %v555 = vrot.slane %v546, %v554
    %558 = vmatprep.subr.mxu0 %v513
    %559 = vmatpush1.msra.mxu0 %v512
    %560 = vmatprep.subr.mxu0 %v511
    %561 = vmatpush1.msra.mxu0 %v510
    %562 = vmatprep.subr.mxu0 %v509
    %563 = vmatpush1.msra.mxu0 %v508
    %564 = vmatprep.subr.mxu0 %v507
    %565 = vmatpush1.msra.mxu0 %v506
    %566 = vmatprep.subr.mxu0 %v505
    %567 = vmatpush1.msra.mxu0 %v504
    %568 = vmatprep.subr.mxu0 %v503
    %569 = vmatpush1.msra.mxu0 %v502
    %570 = vmatprep.subr.mxu0 %v501
    %571 = vmatpush1.msra.mxu0 %v500
    %572 = vmatprep.subr.mxu0 %v499
    %573 = vmatpush1.msra.mxu0 %v498
    %574 = vmatprep.subr.mxu0 %v497
    %575 = vmatpush1.msra.mxu0 %v496
    %576 = vmatprep.subr.mxu0 %v495
    %577 = vmatpush1.msra.mxu0 %v494
    %578 = vmatprep.subr.mxu0 %v493
    %579 = vmatpush1.msra.mxu0 %v492
    %580 = vmatprep.subr.mxu0 %v491
    %581 = vmatpush1.msra.mxu0 %v490
    %582 = vmatprep.subr.mxu0 %v489
    %583 = vmatpush1.msra.mxu0 %v488
    %584 = vmatprep.subr.mxu0 %v487
    %585 = vmatpush1.msra.mxu0 %v486
    %586 = vmatprep.subr.mxu0 %v485
    %587 = vmatpush1.msra.mxu0 %v484
    %588 = vmatprep.subr.mxu0 %v483
    %589 = vmatpush1.msra.mxu0 %v482
    %590 = vmatprep.subr.mxu0 %v545
    %591 = vmatpush2.msra.mxu0 %v544
    %592 = vmatprep.subr.mxu0 %v543
    %593 = vmatpush2.msra.mxu0 %v542
    %594 = vmatprep.subr.mxu0 %v541
    %595 = vmatpush2.msra.mxu0 %v540
    %596 = vmatprep.subr.mxu0 %v539
    %597 = vmatpush2.msra.mxu0 %v538
    %598 = vmatprep.subr.mxu0 %v537
    %599 = vmatpush2.msra.mxu0 %v536
    %600 = vmatprep.subr.mxu0 %v535
    %601 = vmatpush2.msra.mxu0 %v534
    %602 = vmatprep.subr.mxu0 %v533
    %603 = vmatpush2.msra.mxu0 %v532
    %604 = vmatprep.subr.mxu0 %v531
    %605 = vmatpush2.msra.mxu0 %v530
    %606 = vmatprep.subr.mxu0 %v529
    %607 = vmatpush2.msra.mxu0 %v528
    %608 = vmatprep.subr.mxu0 %v527
    %609 = vmatpush2.msra.mxu0 %v526
    %610 = vmatprep.subr.mxu0 %v525
    %611 = vmatpush2.msra.mxu0 %v524
    %612 = vmatprep.subr.mxu0 %v523
    %613 = vmatpush2.msra.mxu0 %v522
    %614 = vmatprep.subr.mxu0 %v521
    %615 = vmatpush2.msra.mxu0 %v520
    %616 = vmatprep.subr.mxu0 %v519
    %617 = vmatpush2.msra.mxu0 %v518
    %618 = vmatprep.subr.mxu0 %v517
    %619 = vmatpush2.msra.mxu0 %v516
    %620 = vmatprep.subr.mxu0 %v515
    %621 = vmatpush2.msra.mxu0 %v514
    %622 = vmatprep.mubr.f32.mxu0 %v479
    %623 = vmatmul.mubr.f32.gmra.mxu0 %v478
    %v624 = vpop.f32.mrf.mxu0
    %v625 = vadd.f32 %v551, %v624
    %v626 = vpop.f32.mrf.mxu0
    %v627 = vadd.f32 %v555, %v626
    %628 = vdwg.mxu0
    %v629 = vmax.f32 %v625, 0.0
    %v630 = vmax.f32 %v627, 0.0
    %v631 = vld [vmem:[#allocation6] sm:$0xff]
    %v632 = vld [vmem:[#allocation6 + $0x8] sm:$0xff]
    %v633 = vld [vmem:[#allocation6 + $0x10] sm:$0xff]
    %v634 = vld [vmem:[#allocation6 + $0x18] sm:$0xff]
    %v635 = vld [vmem:[#allocation6 + $0x20] sm:$0xff]
    %v636 = vld [vmem:[#allocation6 + $0x28] sm:$0xff]
    %v637 = vld [vmem:[#allocation6 + $0x30] sm:$0xff]
    %v638 = vld [vmem:[#allocation6 + $0x38] sm:$0xff]
    %v639 = vld [vmem:[#allocation6 + $0x40] sm:$0xff]
    %v640 = vld [vmem:[#allocation6 + $0x48] sm:$0xff]
    %v641 = vld [vmem:[#allocation6 + $0x50] sm:$0xff]
    %v642 = vld [vmem:[#allocation6 + $0x58] sm:$0xff]
    %v643 = vld [vmem:[#allocation6 + $0x60] sm:$0xff]
    %v644 = vld [vmem:[#allocation6 + $0x68] sm:$0xff]
    %v645 = vld [vmem:[#allocation6 + $0x70] sm:$0xff]
    %v646 = vld [vmem:[#allocation6 + $0x78] sm:$0xff]
    %v647 = vld [vmem:[#allocation6 + $0x80] sm:$0xff]
    %v648 = vld [vmem:[#allocation6 + $0x88] sm:$0xff]
    %v649 = vld [vmem:[#allocation6 + $0x90] sm:$0xff]
    %v650 = vld [vmem:[#allocation6 + $0x98] sm:$0xff]
    %v651 = vld [vmem:[#allocation6 + $0xa0] sm:$0xff]
    %v652 = vld [vmem:[#allocation6 + $0xa8] sm:$0xff]
    %v653 = vld [vmem:[#allocation6 + $0xb0] sm:$0xff]
    %v654 = vld [vmem:[#allocation6 + $0xb8] sm:$0xff]
    %v655 = vld [vmem:[#allocation6 + $0xc0] sm:$0xff]
    %v656 = vld [vmem:[#allocation6 + $0xc8] sm:$0xff]
    %v657 = vld [vmem:[#allocation6 + $0xd0] sm:$0xff]
    %v658 = vld [vmem:[#allocation6 + $0xd8] sm:$0xff]
    %v659 = vld [vmem:[#allocation6 + $0xe0] sm:$0xff]
    %v660 = vld [vmem:[#allocation6 + $0xe8] sm:$0xff]
    %v661 = vld [vmem:[#allocation6 + $0xf0] sm:$0xff]
    %v662 = vld [vmem:[#allocation6 + $0xf8] sm:$0xff]
    %v663 = vld [vmem:[#allocation6 + $0x100] sm:$0xff]
    %v664 = vld [vmem:[#allocation6 + $0x108] sm:$0xff]
    %v665 = vld [vmem:[#allocation6 + $0x110] sm:$0xff]
    %v666 = vld [vmem:[#allocation6 + $0x118] sm:$0xff]
    %v667 = vld [vmem:[#allocation6 + $0x120] sm:$0xff]
    %v668 = vld [vmem:[#allocation6 + $0x128] sm:$0xff]
    %v669 = vld [vmem:[#allocation6 + $0x130] sm:$0xff]
    %v670 = vld [vmem:[#allocation6 + $0x138] sm:$0xff]
    %v671 = vld [vmem:[#allocation6 + $0x140] sm:$0xff]
    %v672 = vld [vmem:[#allocation6 + $0x148] sm:$0xff]
    %v673 = vld [vmem:[#allocation6 + $0x150] sm:$0xff]
    %v674 = vld [vmem:[#allocation6 + $0x158] sm:$0xff]
    %v675 = vld [vmem:[#allocation6 + $0x160] sm:$0xff]
    %v676 = vld [vmem:[#allocation6 + $0x168] sm:$0xff]
    %v677 = vld [vmem:[#allocation6 + $0x170] sm:$0xff]
    %v678 = vld [vmem:[#allocation6 + $0x178] sm:$0xff]
    %v679 = vld [vmem:[#allocation6 + $0x180] sm:$0xff]
    %v680 = vld [vmem:[#allocation6 + $0x188] sm:$0xff]
    %v681 = vld [vmem:[#allocation6 + $0x190] sm:$0xff]
    %v682 = vld [vmem:[#allocation6 + $0x198] sm:$0xff]
    %v683 = vld [vmem:[#allocation6 + $0x1a0] sm:$0xff]
    %v684 = vld [vmem:[#allocation6 + $0x1a8] sm:$0xff]
    %v685 = vld [vmem:[#allocation6 + $0x1b0] sm:$0xff]
    %v686 = vld [vmem:[#allocation6 + $0x1b8] sm:$0xff]
    %v687 = vld [vmem:[#allocation6 + $0x1c0] sm:$0xff]
    %v688 = vld [vmem:[#allocation6 + $0x1c8] sm:$0xff]
    %v689 = vld [vmem:[#allocation6 + $0x1d0] sm:$0xff]
    %v690 = vld [vmem:[#allocation6 + $0x1d8] sm:$0xff]
    %v691 = vld [vmem:[#allocation6 + $0x1e0] sm:$0xff]
    %v692 = vld [vmem:[#allocation6 + $0x1e8] sm:$0xff]
    %v693 = vld [vmem:[#allocation6 + $0x1f0] sm:$0xff]
    %v694 = vld [vmem:[#allocation6 + $0x1f8] sm:$0xff]
    %v695 = vld [vmem:[#allocation7] sm:$0x3]
    %v697 = vlaneseq
    %v698 = vshrl.u32 %v697, 7
    %v699 = vsub.s32 0, %v698
    %v700 = vrot.slane %v695, %v699
    %v701 = vlaneseq
    %v702 = vshrl.u32 %v701, 7
    %v703 = vsub.s32 1, %v702
    %v704 = vrot.slane %v695, %v703
    %707 = vmatprep.subr.mxu0 %v662
    %708 = vmatpush1.msra.mxu0 %v661
    %709 = vmatprep.subr.mxu0 %v660
    %710 = vmatpush1.msra.mxu0 %v659
    %711 = vmatprep.subr.mxu0 %v658
    %712 = vmatpush1.msra.mxu0 %v657
    %713 = vmatprep.subr.mxu0 %v656
    %714 = vmatpush1.msra.mxu0 %v655
    %715 = vmatprep.subr.mxu0 %v654
    %716 = vmatpush1.msra.mxu0 %v653
    %717 = vmatprep.subr.mxu0 %v652
    %718 = vmatpush1.msra.mxu0 %v651
    %719 = vmatprep.subr.mxu0 %v650
    %720 = vmatpush1.msra.mxu0 %v649
    %721 = vmatprep.subr.mxu0 %v648
    %722 = vmatpush1.msra.mxu0 %v647
    %723 = vmatprep.subr.mxu0 %v646
    %724 = vmatpush1.msra.mxu0 %v645
    %725 = vmatprep.subr.mxu0 %v644
    %726 = vmatpush1.msra.mxu0 %v643
    %727 = vmatprep.subr.mxu0 %v642
    %728 = vmatpush1.msra.mxu0 %v641
    %729 = vmatprep.subr.mxu0 %v640
    %730 = vmatpush1.msra.mxu0 %v639
    %731 = vmatprep.subr.mxu0 %v638
    %732 = vmatpush1.msra.mxu0 %v637
    %733 = vmatprep.subr.mxu0 %v636
    %734 = vmatpush1.msra.mxu0 %v635
    %735 = vmatprep.subr.mxu0 %v634
    %736 = vmatpush1.msra.mxu0 %v633
    %737 = vmatprep.subr.mxu0 %v632
    %738 = vmatpush1.msra.mxu0 %v631
    %739 = vmatprep.subr.mxu0 %v694
    %740 = vmatpush2.msra.mxu0 %v693
    %741 = vmatprep.subr.mxu0 %v692
    %742 = vmatpush2.msra.mxu0 %v691
    %743 = vmatprep.subr.mxu0 %v690
    %744 = vmatpush2.msra.mxu0 %v689
    %745 = vmatprep.subr.mxu0 %v688
    %746 = vmatpush2.msra.mxu0 %v687
    %747 = vmatprep.subr.mxu0 %v686
    %748 = vmatpush2.msra.mxu0 %v685
    %749 = vmatprep.subr.mxu0 %v684
    %750 = vmatpush2.msra.mxu0 %v683
    %751 = vmatprep.subr.mxu0 %v682
    %752 = vmatpush2.msra.mxu0 %v681
    %753 = vmatprep.subr.mxu0 %v680
    %754 = vmatpush2.msra.mxu0 %v679
    %755 = vmatprep.subr.mxu0 %v678
    %756 = vmatpush2.msra.mxu0 %v677
    %757 = vmatprep.subr.mxu0 %v676
    %758 = vmatpush2.msra.mxu0 %v675
    %759 = vmatprep.subr.mxu0 %v674
    %760 = vmatpush2.msra.mxu0 %v673
    %761 = vmatprep.subr.mxu0 %v672
    %762 = vmatpush2.msra.mxu0 %v671
    %763 = vmatprep.subr.mxu0 %v670
    %764 = vmatpush2.msra.mxu0 %v669
    %765 = vmatprep.subr.mxu0 %v668
    %766 = vmatpush2.msra.mxu0 %v667
    %767 = vmatprep.subr.mxu0 %v666
    %768 = vmatpush2.msra.mxu0 %v665
    %769 = vmatprep.subr.mxu0 %v664
    %770 = vmatpush2.msra.mxu0 %v663
    %771 = vmatprep.mubr.f32.mxu0 %v481
    %772 = vmatmul.mubr.f32.gmra.mxu0 %v480
    %v773 = vpop.f32.mrf.mxu0
    %v774 = vadd.f32 %v700, %v773
    %v775 = vpop.f32.mrf.mxu0
    %v776 = vadd.f32 %v704, %v775
    %777 = vdwg.mxu0
    %v778 = vmax.f32 %v774, 0.0
    %v779 = vmax.f32 %v776, 0.0
    %v780 = vld [vmem:[%s9] sm:$0xff]
    %v781 = vld [vmem:[%s9 + $0x8] sm:$0xff]
    %v782 = vld [vmem:[%s9 + $0x10] sm:$0xff]
    %v783 = vld [vmem:[%s9 + $0x18] sm:$0xff]
    %v784 = vld [vmem:[%s9 + $0x20] sm:$0xff]
    %v785 = vld [vmem:[%s9 + $0x28] sm:$0xff]
    %v786 = vld [vmem:[%s9 + $0x30] sm:$0xff]
    %v787 = vld [vmem:[%s9 + $0x38] sm:$0xff]
    %v788 = vld [vmem:[%s9 + $0x40] sm:$0xff]
    %v789 = vld [vmem:[%s9 + $0x48] sm:$0xff]
    %v790 = vld [vmem:[%s9 + $0x50] sm:$0xff]
    %v791 = vld [vmem:[%s9 + $0x58] sm:$0xff]
    %v792 = vld [vmem:[%s9 + $0x60] sm:$0xff]
    %v793 = vld [vmem:[%s9 + $0x68] sm:$0xff]
    %v794 = vld [vmem:[%s9 + $0x70] sm:$0xff]
    %v795 = vld [vmem:[%s9 + $0x78] sm:$0xff]
    %v796 = vld [vmem:[%s9 + $0x80] sm:$0xff]
    %v797 = vld [vmem:[%s9 + $0x88] sm:$0xff]
    %v798 = vld [vmem:[%s9 + $0x90] sm:$0xff]
    %v799 = vld [vmem:[%s9 + $0x98] sm:$0xff]
    %v800 = vld [vmem:[%s9 + $0xa0] sm:$0xff]
    %v801 = vld [vmem:[%s9 + $0xa8] sm:$0xff]
    %v802 = vld [vmem:[%s9 + $0xb0] sm:$0xff]
    %v803 = vld [vmem:[%s9 + $0xb8] sm:$0xff]
    %v804 = vld [vmem:[%s9 + $0xc0] sm:$0xff]
    %v805 = vld [vmem:[%s9 + $0xc8] sm:$0xff]
    %v806 = vld [vmem:[%s9 + $0xd0] sm:$0xff]
    %v807 = vld [vmem:[%s9 + $0xd8] sm:$0xff]
    %v808 = vld [vmem:[%s9 + $0xe0] sm:$0xff]
    %v809 = vld [vmem:[%s9 + $0xe8] sm:$0xff]
    %v810 = vld [vmem:[%s9 + $0xf0] sm:$0xff]
    %v811 = vld [vmem:[%s9 + $0xf8] sm:$0xff]
    %v812 = vld [vmem:[%s9 + $0x100] sm:$0xff]
    %v813 = vld [vmem:[%s9 + $0x108] sm:$0xff]
    %v814 = vld [vmem:[%s9 + $0x110] sm:$0xff]
    %v815 = vld [vmem:[%s9 + $0x118] sm:$0xff]
    %v816 = vld [vmem:[%s9 + $0x120] sm:$0xff]
    %v817 = vld [vmem:[%s9 + $0x128] sm:$0xff]
    %v818 = vld [vmem:[%s9 + $0x130] sm:$0xff]
    %v819 = vld [vmem:[%s9 + $0x138] sm:$0xff]
    %v820 = vld [vmem:[%s9 + $0x140] sm:$0xff]
    %v821 = vld [vmem:[%s9 + $0x148] sm:$0xff]
    %v822 = vld [vmem:[%s9 + $0x150] sm:$0xff]
    %v823 = vld [vmem:[%s9 + $0x158] sm:$0xff]
    %v824 = vld [vmem:[%s9 + $0x160] sm:$0xff]
    %v825 = vld [vmem:[%s9 + $0x168] sm:$0xff]
    %v826 = vld [vmem:[%s9 + $0x170] sm:$0xff]
    %v827 = vld [vmem:[%s9 + $0x178] sm:$0xff]
    %v828 = vld [vmem:[%s9 + $0x180] sm:$0xff]
    %v829 = vld [vmem:[%s9 + $0x188] sm:$0xff]
    %v830 = vld [vmem:[%s9 + $0x190] sm:$0xff]
    %v831 = vld [vmem:[%s9 + $0x198] sm:$0xff]
    %v832 = vld [vmem:[%s9 + $0x1a0] sm:$0xff]
    %v833 = vld [vmem:[%s9 + $0x1a8] sm:$0xff]
    %v834 = vld [vmem:[%s9 + $0x1b0] sm:$0xff]
    %v835 = vld [vmem:[%s9 + $0x1b8] sm:$0xff]
    %v836 = vld [vmem:[%s9 + $0x1c0] sm:$0xff]
    %v837 = vld [vmem:[%s9 + $0x1c8] sm:$0xff]
    %v838 = vld [vmem:[%s9 + $0x1d0] sm:$0xff]
    %v839 = vld [vmem:[%s9 + $0x1d8] sm:$0xff]
    %v840 = vld [vmem:[%s9 + $0x1e0] sm:$0xff]
    %v841 = vld [vmem:[%s9 + $0x1e8] sm:$0xff]
    %v842 = vld [vmem:[%s9 + $0x1f0] sm:$0xff]
    %v843 = vld [vmem:[%s9 + $0x1f8] sm:$0xff]
    %844 = vmatprep.subr.mxu0 0.0
    %845 = vmatpush1.msra.mxu0 %v827
    %846 = vmatprep.subr.mxu0 0.0
    %847 = vmatpush1.msra.mxu0 %v826
    %848 = vmatprep.subr.mxu0 0.0
    %849 = vmatpush1.msra.mxu0 %v825
    %850 = vmatprep.subr.mxu0 0.0
    %851 = vmatpush1.msra.mxu0 %v824
    %852 = vmatprep.subr.mxu0 0.0
    %853 = vmatpush1.msra.mxu0 %v823
    %854 = vmatprep.subr.mxu0 0.0
    %855 = vmatpush1.msra.mxu0 %v822
    %856 = vmatprep.subr.mxu0 0.0
    %857 = vmatpush1.msra.mxu0 %v821
    %858 = vmatprep.subr.mxu0 0.0
    %859 = vmatpush1.msra.mxu0 %v820
    %860 = vmatprep.subr.mxu0 0.0
    %861 = vmatpush1.msra.mxu0 %v819
    %862 = vmatprep.subr.mxu0 0.0
    %863 = vmatpush1.msra.mxu0 %v818
    %864 = vmatprep.subr.mxu0 0.0
    %865 = vmatpush1.msra.mxu0 %v817
    %866 = vmatprep.subr.mxu0 0.0
    %867 = vmatpush1.msra.mxu0 %v816
    %868 = vmatprep.subr.mxu0 0.0
    %869 = vmatpush1.msra.mxu0 %v815
    %870 = vmatprep.subr.mxu0 0.0
    %871 = vmatpush1.msra.mxu0 %v814
    %872 = vmatprep.subr.mxu0 0.0
    %873 = vmatpush1.msra.mxu0 %v813
    %874 = vmatprep.subr.mxu0 0.0
    %875 = vmatpush1.msra.mxu0 %v812
    %876 = vmatprep.subr.mxu0 0.0
    %877 = vmatpush2.msra.mxu0 %v843
    %878 = vmatprep.subr.mxu0 0.0
    %879 = vmatpush2.msra.mxu0 %v842
    %880 = vmatprep.subr.mxu0 0.0
    %881 = vmatpush2.msra.mxu0 %v841
    %882 = vmatprep.subr.mxu0 0.0
    %883 = vmatpush2.msra.mxu0 %v840
    %884 = vmatprep.subr.mxu0 0.0
    %885 = vmatpush2.msra.mxu0 %v839
    %886 = vmatprep.subr.mxu0 0.0
    %887 = vmatpush2.msra.mxu0 %v838
    %888 = vmatprep.subr.mxu0 0.0
    %889 = vmatpush2.msra.mxu0 %v837
    %890 = vmatprep.subr.mxu0 0.0
    %891 = vmatpush2.msra.mxu0 %v836
    %892 = vmatprep.subr.mxu0 0.0
    %893 = vmatpush2.msra.mxu0 %v835
    %894 = vmatprep.subr.mxu0 0.0
    %895 = vmatpush2.msra.mxu0 %v834
    %896 = vmatprep.subr.mxu0 0.0
    %897 = vmatpush2.msra.mxu0 %v833
    %898 = vmatprep.subr.mxu0 0.0
    %899 = vmatpush2.msra.mxu0 %v832
    %900 = vmatprep.subr.mxu0 0.0
    %901 = vmatpush2.msra.mxu0 %v831
    %902 = vmatprep.subr.mxu0 0.0
    %903 = vmatpush2.msra.mxu0 %v830
    %904 = vmatprep.subr.mxu0 0.0
    %905 = vmatpush2.msra.mxu0 %v829
    %906 = vmatprep.subr.mxu0 0.0
    %907 = vmatpush2.msra.mxu0 %v828
    %908 = vmatprep.mubr.f32.mxu0 %v779
    %909 = vmatmul.mubr.f32.gmra.mxu0 %v778
    %v910 = vpop.f32.mrf.mxu0
    %v911 = vadd.f32 0.0, %v910
    %v912 = vpop.f32.mrf.mxu0
    %913 = vdwg.mxu0
    %914 = vmatprep.subr.mxu0 0.0
    %915 = vmatpush1.msra.mxu0 %v795
    %916 = vmatprep.subr.mxu0 0.0
    %917 = vmatpush1.msra.mxu0 %v794
    %918 = vmatprep.subr.mxu0 0.0
    %919 = vmatpush1.msra.mxu0 %v793
    %920 = vmatprep.subr.mxu0 0.0
    %921 = vmatpush1.msra.mxu0 %v792
    %922 = vmatprep.subr.mxu0 0.0
    %923 = vmatpush1.msra.mxu0 %v791
    %924 = vmatprep.subr.mxu0 0.0
    %925 = vmatpush1.msra.mxu0 %v790
    %926 = vmatprep.subr.mxu0 0.0
    %927 = vmatpush1.msra.mxu0 %v789
    %928 = vmatprep.subr.mxu0 0.0
    %929 = vmatpush1.msra.mxu0 %v788
    %930 = vmatprep.subr.mxu0 0.0
    %931 = vmatpush1.msra.mxu0 %v787
    %932 = vmatprep.subr.mxu0 0.0
    %933 = vmatpush1.msra.mxu0 %v786
    %934 = vmatprep.subr.mxu0 0.0
    %935 = vmatpush1.msra.mxu0 %v785
    %936 = vmatprep.subr.mxu0 0.0
    %937 = vmatpush1.msra.mxu0 %v784
    %938 = vmatprep.subr.mxu0 0.0
    %939 = vmatpush1.msra.mxu0 %v783
    %940 = vmatprep.subr.mxu0 0.0
    %941 = vmatpush1.msra.mxu0 %v782
    %942 = vmatprep.subr.mxu0 0.0
    %943 = vmatpush1.msra.mxu0 %v781
    %944 = vmatprep.subr.mxu0 0.0
    %945 = vmatpush1.msra.mxu0 %v780
    %946 = vmatprep.subr.mxu0 0.0
    %947 = vmatpush2.msra.mxu0 %v811
    %948 = vmatprep.subr.mxu0 0.0
    %949 = vmatpush2.msra.mxu0 %v810
    %950 = vmatprep.subr.mxu0 0.0
    %951 = vmatpush2.msra.mxu0 %v809
    %952 = vmatprep.subr.mxu0 0.0
    %953 = vmatpush2.msra.mxu0 %v808
    %954 = vmatprep.subr.mxu0 0.0
    %955 = vmatpush2.msra.mxu0 %v807
    %956 = vmatprep.subr.mxu0 0.0
    %957 = vmatpush2.msra.mxu0 %v806
    %958 = vmatprep.subr.mxu0 0.0
    %959 = vmatpush2.msra.mxu0 %v805
    %960 = vmatprep.subr.mxu0 0.0
    %961 = vmatpush2.msra.mxu0 %v804
    %962 = vmatprep.subr.mxu0 0.0
    %963 = vmatpush2.msra.mxu0 %v803
    %964 = vmatprep.subr.mxu0 0.0
    %965 = vmatpush2.msra.mxu0 %v802
    %966 = vmatprep.subr.mxu0 0.0
    %967 = vmatpush2.msra.mxu0 %v801
    %968 = vmatprep.subr.mxu0 0.0
    %969 = vmatpush2.msra.mxu0 %v800
    %970 = vmatprep.subr.mxu0 0.0
    %971 = vmatpush2.msra.mxu0 %v799
    %972 = vmatprep.subr.mxu0 0.0
    %973 = vmatpush2.msra.mxu0 %v798
    %974 = vmatprep.subr.mxu0 0.0
    %975 = vmatpush2.msra.mxu0 %v797
    %976 = vmatprep.subr.mxu0 0.0
    %977 = vmatpush2.msra.mxu0 %v796
    %978 = vmatprep.mubr.f32.mxu0 %v630
    %979 = vmatmul.mubr.f32.gmra.mxu0 %v629
    %v980 = vpop.f32.mrf.mxu0
    %v981 = vadd.f32 %v911, %v980
    %v982 = vpop.f32.mrf.mxu0
    %983 = vdwg.mxu0
    %v984 = vld [vmem:[%s10] sm:$0x1]
    %v986 = vlaneseq
    %v987 = vshrl.u32 %v986, 7
    %v988 = vsub.s32 0, %v987
    %v989 = vrot.slane %v984, %v988
    %v991 = vadd.f32 %v981, %v989
    %992 = vst.msk [vmem:[%s11] sm:$0xff] %vm138, %v991
    // Predicated region
    $region62: #{tpu_custom_call.1} parent=1 // pred_check
      _
    $region63: #{tpu_custom_call.1} parent=1 // pred_check_branch
      %994 = sbr.rel (0) target = $region65
    $region64: #{tpu_custom_call.1} parent=1 // pred_region
      _
    $region65: #{tpu_custom_call.1} parent=1 // pred_fallthru
      _
    // Predicated region
    $region66: #{tpu_custom_call.1} parent=1 // pred_check
      _
    $region67: #{tpu_custom_call.1} parent=1 // pred_check_branch
      %996 = sbr.rel (0) target = $region69
    $region68: #{tpu_custom_call.1} parent=1 // pred_region
      _
    $region69: #{tpu_custom_call.1} parent=1 // pred_fallthru
      _
    %997 = vsyncpa [#allocation3], 1
    %998 = vsyncpa [#allocation5], 1
    %999 = vsyncpa [#allocation8], 1

</llo_original>
